<compile_context>
chip_gen: v7x
topology: tpu7x:2x2x1
jax: 0.10.0
libtpu: 0.0.40
codegen_flags: <defaults>
</compile_context>

<pallas_src>
import jax
import jax.numpy as jnp
from jax.experimental import pallas as pl
from jax.experimental.pallas import tpu as pltpu


def _identity_kernel(x_ref, o_ref):
    # Straight VMEM tile copy.
    o_ref[...] = x_ref[...]


def _sublane_multiple(dtype):
    # Second-to-last block dim must be a multiple of 8 (4B), 16 (2B), 32 (1B)
    # unless it equals the full dim.
    itemsize = jnp.dtype(dtype).itemsize
    return max(8, 32 // max(1, itemsize))


def _budgets():
    """(tile_budget_bytes, vmem_limit_bytes) tuned per TPU generation."""
    try:
        kind = jax.devices()[0].device_kind.lower()
    except Exception:
        kind = ""
    if "v5" in kind:
        # 2 inputs-bufs + 2 output-bufs x 3 MiB = 12 MiB < v5e's 16 MiB
        # scoped-VMEM default; keep the limit modest anyway.
        return 3 * 1024 * 1024, 32 * 1024 * 1024
    # v6e / v7x: 8 MiB tiles -> 4 x 8 = 32 MiB of buffers; raise the scoped
    # limit above the 32 MiB default (well under v7x's 64 MiB physical VMEM).
    return 8 * 1024 * 1024, 40 * 1024 * 1024


def _round_up(n, m):
    return ((n + m - 1) // m) * m


def _identity_pallas(x):
    """Explicit Pallas copy: returns a fresh array equal to x."""
    orig_shape = x.shape
    dtype = x.dtype
    itemsize = jnp.dtype(dtype).itemsize
    sub = _sublane_multiple(dtype)
    tile_budget, vmem_limit = _budgets()

    # Collapse leading dims only; the minor dim is left untouched so this
    # reshape does not force a physical relayout on TPU's (8,128) tiling.
    if x.ndim == 0:
        x2d = x.reshape(1, 1)
    elif x.ndim == 1:
        x2d = x.reshape(1, x.shape[0])
    else:
        x2d = x.reshape(-1, orig_shape[-1])
    R, C = x2d.shape
    total_bytes = R * C * itemsize

    # Column tile: only split the lane axis when even a sublane-height stripe
    # of full rows would exceed the tile budget AND C is 128-divisible (legal).
    if C % 128 == 0 and C * itemsize * sub > tile_budget:
        lanes = max(128, ((tile_budget // (sub * itemsize)) // 128) * 128)
        tile_c = min(C, lanes)
    else:
        tile_c = C  # full-extent last dim is always a legal block dim

    # Row tile: multiple of the sublane count, sized to the tile budget.
    rows = max(sub, ((tile_budget // max(1, tile_c * itemsize)) // sub) * sub)
    tile_r = min(R, rows)

    # Give the grid at least 2 steps on larger arrays so the "parallel" axes
    # can be split across v7x's two TensorCores (neutral on v5e/v6e).
    if total_bytes > 2 * 1024 * 1024 and tile_r == R and R > sub:
        tile_r = max(sub, min(R, _round_up(pl.cdiv(R, 2), sub)))
        if tile_r < R and tile_r % sub != 0:
            tile_r = R  # safety: keep the block legal

    grid = (pl.cdiv(R, tile_r), pl.cdiv(C, tile_c))

    out2d = pl.pallas_call(
        _identity_kernel,
        out_shape=jax.ShapeDtypeStruct((R, C), dtype),
        grid=grid,
        in_specs=[pl.BlockSpec((tile_r, tile_c), lambda i, j: (i, j))],
        out_specs=pl.BlockSpec((tile_r, tile_c), lambda i, j: (i, j)),
        compiler_params=pltpu.CompilerParams(
            dimension_semantics=("parallel", "parallel"),
            vmem_limit_bytes=vmem_limit,
        ),
    )(x2d)

    return out2d.reshape(orig_shape)


def identity(x, *, force_kernel=False):
    """Identity.forward(x) == x.

    Default: zero-HBM-traffic pass-through (`return x`) — the optimal
    Identity (no dispatch, no read/write of the array). Set
    force_kernel=True to materialize a fresh copy through the Pallas copy
    pipeline (e.g. when a physically distinct output buffer is required).
    """
    if x.size == 0 or not force_kernel:
        return x
    return _identity_pallas(x)


if __name__ == "__main__":
    key = jax.random.PRNGKey(0)
    # Small NCHW input consistent with a conv-style search cell:
    # (N=2, C=4, H=16, W=16) — 32 KiB, handled by the zero-copy fast path.
    x = jax.random.normal(key, (2, 4, 16, 16), dtype=jnp.float32)

    # Default path: pure pass-through (no kernel launch).
    y_fast = jax.block_until_ready(identity(x))
    assert y_fast.shape == x.shape and y_fast.dtype == x.dtype
    assert bool(jnp.all(y_fast == x))

    # Forced kernel path: exercises the actual Pallas copy on the same shape
    # (collapses to a (128, 16) view; full-extent last dim, sublane-legal rows).
    y_kern = jax.block_until_ready(identity(x, force_kernel=True))
    assert y_kern.shape == x.shape and y_kern.dtype == x.dtype
    assert bool(jnp.all(y_kern == x))

    # Lane-dense shape (last dim a multiple of 128) through the kernel path.
    x2 = jax.random.normal(jax.random.PRNGKey(1), (64, 384), dtype=jnp.float32)
    y2 = jax.block_until_ready(identity(x2, force_kernel=True))
    assert bool(jnp.all(y2 == x2))

    # Larger (8 MiB) array: exercises row tiling / the >=2-grid-step split.
    x3 = jax.random.normal(jax.random.PRNGKey(2), (4096, 512), dtype=jnp.float32)
    y3 = jax.block_until_ready(identity(x3, force_kernel=True))
    assert bool(jnp.all(y3 == x3))

    print("KERNEL_OK")
</pallas_src>

<mosaic_0001>
module attributes {stable_mosaic.version = 11 : i64} {
  func.func @_identity_kernel(%arg0: i32, %arg1: i32, %arg2: memref<128x16xf32, #tpu.memory_space<vmem>>, %arg3: memref<128x16xf32, #tpu.memory_space<vmem>>) attributes {dimension_semantics = [#tpu.dimension_semantics<parallel>, #tpu.dimension_semantics<parallel>], iteration_bounds = array<i64: 1, 1>, scalar_prefetch = 0 : i64, scratch_operands = 0 : i64, tpu.core_type = #tpu.core_type<tc>, window_params = [{transform_indices = @transform_0, window_bounds = array<i64: 128, 16>}, {transform_indices = @transform_1, window_bounds = array<i64: 128, 16>}]} {
    %c0 = arith.constant 0 : index
    %c0_0 = arith.constant 0 : index
    %0 = vector.load %arg2[%c0, %c0_0] : memref<128x16xf32, #tpu.memory_space<vmem>>, vector<128x16xf32>
    %c0_1 = arith.constant 0 : index
    %c0_2 = arith.constant 0 : index
    %1 = vector.load %arg3[%c0_1, %c0_2] : memref<128x16xf32, #tpu.memory_space<vmem>>, vector<128x16xf32>
    tpu.vector_store %arg3[%c0_1, %c0_2], %0 {strides = array<i32>} : memref<128x16xf32, #tpu.memory_space<vmem>>, vector<128x16xf32>,
    return
  }
  func.func @transform_0(%arg0: i32, %arg1: i32) -> (i32, i32) {
    %c0_i32 = arith.constant 0 : i32
    return %arg0, %arg1 : i32, i32
  }
  func.func @transform_1(%arg0: i32, %arg1: i32) -> (i32, i32) {
    %c0_i32 = arith.constant 0 : i32
    return %arg0, %arg1 : i32, i32
  }
}

</mosaic_0001>

<llo_original>
// kernel: tpu_custom_call.1
$region0: #{tpu_custom_call.1}
  #allocation0 [shape = 'u32[]', space=smem, size = 0x4, offset = 0x4, fixed_abs, tag = 'smem constant byte address 0x4 - core index']
  #allocation1 [shape = 'u32[144,128]{1,0:T(1,128)}', space=vmem, size = 0x12000, scoped, tag = 'internal scratch']
  %s0 = inlined_call_operand.vmem [shape: f32[128,16], index: 0, kind: input, shape index: {}]
  %s1 = inlined_call_operand.vmem [shape: f32[128,16], index: 1, kind: output, shape index: {}]
  %s2 = sld [smem:[#allocation0]]
  $region14: #{tpu_custom_call.1} parent=0
    _
  %s4 = ssub.s32 1, %s2
  %s5 = scalar_select 0, %s4, %s2
  // Predicated region
  $region2: #{tpu_custom_call.1} parent=0 // pred_check
    _
  $region3: #{tpu_custom_call.1} parent=0 // pred_check_branch
    %7 = sbr.rel (0) target = $region5
  $region4: #{tpu_custom_call.1} parent=0 // pred_region
    _
  $region5: #{tpu_custom_call.1} parent=0 // pred_fallthru
    _
  %v8 = vld [vmem:[%s0] sm:$0xff]
  %v9 = vld [vmem:[%s0 + $0x8] sm:$0xff]
  %v10 = vld [vmem:[%s0 + $0x10] sm:$0xff]
  %v11 = vld [vmem:[%s0 + $0x18] sm:$0xff]
  %v12 = vld [vmem:[%s0 + $0x20] sm:$0xff]
  %v13 = vld [vmem:[%s0 + $0x28] sm:$0xff]
  %v14 = vld [vmem:[%s0 + $0x30] sm:$0xff]
  %v15 = vld [vmem:[%s0 + $0x38] sm:$0xff]
  %v16 = vld [vmem:[%s0 + $0x40] sm:$0xff]
  %v17 = vld [vmem:[%s0 + $0x48] sm:$0xff]
  %v18 = vld [vmem:[%s0 + $0x50] sm:$0xff]
  %v19 = vld [vmem:[%s0 + $0x58] sm:$0xff]
  %v20 = vld [vmem:[%s0 + $0x60] sm:$0xff]
  %v21 = vld [vmem:[%s0 + $0x68] sm:$0xff]
  %v22 = vld [vmem:[%s0 + $0x70] sm:$0xff]
  %v23 = vld [vmem:[%s0 + $0x78] sm:$0xff]
  %vm24 = vcmask 130048
  %25 = vst.msk [vmem:[%s1] sm:$0xff] %vm24, %v8
  %26 = vst.msk [vmem:[%s1 + $0x8] sm:$0xff] %vm24, %v9
  %27 = vst.msk [vmem:[%s1 + $0x10] sm:$0xff] %vm24, %v10
  %28 = vst.msk [vmem:[%s1 + $0x18] sm:$0xff] %vm24, %v11
  %29 = vst.msk [vmem:[%s1 + $0x20] sm:$0xff] %vm24, %v12
  %30 = vst.msk [vmem:[%s1 + $0x28] sm:$0xff] %vm24, %v13
  %31 = vst.msk [vmem:[%s1 + $0x30] sm:$0xff] %vm24, %v14
  %32 = vst.msk [vmem:[%s1 + $0x38] sm:$0xff] %vm24, %v15
  %33 = vst.msk [vmem:[%s1 + $0x40] sm:$0xff] %vm24, %v16
  %34 = vst.msk [vmem:[%s1 + $0x48] sm:$0xff] %vm24, %v17
  %35 = vst.msk [vmem:[%s1 + $0x50] sm:$0xff] %vm24, %v18
  %36 = vst.msk [vmem:[%s1 + $0x58] sm:$0xff] %vm24, %v19
  %37 = vst.msk [vmem:[%s1 + $0x60] sm:$0xff] %vm24, %v20
  %38 = vst.msk [vmem:[%s1 + $0x68] sm:$0xff] %vm24, %v21
  %39 = vst.msk [vmem:[%s1 + $0x70] sm:$0xff] %vm24, %v22
  %40 = vst.msk [vmem:[%s1 + $0x78] sm:$0xff] %vm24, %v23
  // Predicated region
  $region6: #{tpu_custom_call.1} parent=0 // pred_check
    _
  $region7: #{tpu_custom_call.1} parent=0 // pred_check_branch
    %42 = sbr.rel (0) target = $region9
  $region8: #{tpu_custom_call.1} parent=0 // pred_region
    _
  $region9: #{tpu_custom_call.1} parent=0 // pred_fallthru
    _
  // Predicated region
  $region10: #{tpu_custom_call.1} parent=0 // pred_check
    _
  $region11: #{tpu_custom_call.1} parent=0 // pred_check_branch
    %44 = sbr.rel (0) target = $region13
  $region12: #{tpu_custom_call.1} parent=0 // pred_region
    _
  $region13: #{tpu_custom_call.1} parent=0 // pred_fallthru
    _

</llo_original>
